<compile_context>
chip_gen: v6e
topology: v6e:2x2x1
jax: 0.10.0
libtpu: 0.0.40
codegen_flags: <defaults>
</compile_context>

<pallas_src>
import functools

import jax
import jax.numpy as jnp
import numpy as np
from jax import lax
from jax.experimental import pallas as pl
from jax.experimental.pallas import tpu as pltpu

_NUM_CORE_BLOCKS = 2  # pass-1 M split; maps to v7x's 2 TensorCores, harmless on 1-TC chips


def _round_up(x, m):
    return (x + m - 1) // m * m


def _vmem_limit_bytes():
    """Generation-aware scoped-VMEM limit (v7x: 64 MiB/TC, v5e/v6e: 128 MiB)."""
    try:
        cap = pltpu.get_tpu_info().vmem_capacity_bytes
    except Exception:
        cap = 64 * 1024 * 1024  # conservative fallback
    return int(min(96 * 1024 * 1024, max(32 * 1024 * 1024, cap * 5 // 8)))


def _stats_kernel(p_ref, w_ref, stats_ref):
    """Pass 1: per-channel sum / sum-of-squares of y = patches @ W.

    grid = (core, m_tile).  core axis is "parallel" -> each core owns its own
    (8, Cp) partial-stats output block; the M axis is "arbitrary" -> sequential
    accumulation into that VMEM-resident block (init via pl.when).
      p_ref:     (tile_m, K) bf16 patch tile (streamed)
      w_ref:     (K, Cp)     bf16 weights (VMEM-resident across the grid)
      stats_ref: (8, Cp)     f32; row 0 = sum, row 1 = sum of squares
    """
    @pl.when(pl.program_id(1) == 0)
    def _init():
        stats_ref[...] = jnp.zeros_like(stats_ref)

    y = jnp.dot(p_ref[...], w_ref[...], preferred_element_type=jnp.float32)
    upd = jnp.concatenate(
        [jnp.sum(y, axis=0, keepdims=True),
         jnp.sum(y * y, axis=0, keepdims=True)],
        axis=0)                                   # (2, Cp)
    stats_ref[pl.ds(0, 2), :] += upd              # single combined RMW per tile


def _norm_kernel(p_ref, w_ref, scale_ref, shift_ref, o_ref, *, slope, cout):
    """Pass 2: recompute y = patches @ W, fused BN affine + LeakyReLU, narrow store."""
    y = jnp.dot(p_ref[...], w_ref[...], preferred_element_type=jnp.float32)
    z = y * scale_ref[...] + shift_ref[...]       # mul+add on the VPU (ample slack)
    z = jnp.maximum(z, slope * z)                 # LeakyReLU, 0 < slope < 1
    o_ref[...] = z[:, :cout]                      # store only the real channels


def conv_pool_forward(x, w, b, gamma, beta, *, eps=1e-5, slope=1e-5, tile_m=2048):
    """x: (N, Cin, D, H, W) f32, w: (Cout, Cin, 3, 3, 3), b/gamma/beta: (Cout,)."""
    N, Cin, D, H, W = x.shape
    Cout = w.shape[0]
    Do, Ho, Wo = (D + 1) // 2, (H + 1) // 2, (W + 1) // 2
    # Conv bias cancels exactly under train-mode BatchNorm mean subtraction.
    del b

    # --- glue: NCDHW -> channels-last bf16, pad, im2col -> (M, K) patch matrix ---
    xp = jnp.transpose(x, (0, 2, 3, 4, 1)).astype(jnp.bfloat16)   # (N, D, H, W, Cin)
    xp = jnp.pad(xp, ((0, 0), (1, 1), (1, 1), (1, 1), (0, 0)))
    cols = []
    for kd in range(3):
        for kh in range(3):
            for kw in range(3):
                cols.append(
                    xp[:, kd:kd + 2 * Do - 1:2, kh:kh + 2 * Ho - 1:2,
                       kw:kw + 2 * Wo - 1:2, :]
                )
    patches = jnp.stack(cols, axis=-2)            # (N, Do, Ho, Wo, 27, Cin)
    M = N * Do * Ho * Wo
    K = 27 * Cin                                  # kept unpadded (block == full dim)
    patches = patches.reshape(M, K)

    # --- pad Cout -> 128 lanes for the MXU; M -> multiple of cores*tile_m -------
    Cp = max(128, _round_up(Cout, 128))
    tile_m = max(8, _round_up(min(tile_m, M), 8))
    Mp = _round_up(M, _NUM_CORE_BLOCKS * tile_m)
    nm = Mp // tile_m
    nm_half = nm // _NUM_CORE_BLOCKS

    patches = jnp.pad(patches, ((0, Mp - M), (0, 0)))   # zero rows are inert in sums
    wmat = jnp.transpose(w, (2, 3, 4, 1, 0)).reshape(K, Cout).astype(jnp.bfloat16)
    wmat = jnp.pad(wmat, ((0, 0), (0, Cp - Cout)))
    gamma_p = jnp.pad(gamma.astype(jnp.float32), (0, Cp - Cout))
    beta_p = jnp.pad(beta.astype(jnp.float32), (0, Cp - Cout))

    vmem_limit = _vmem_limit_bytes()

    # --- pass 1: per-channel sum / sum-of-squares with per-core partial blocks --
    stats = pl.pallas_call(
        _stats_kernel,
        out_shape=jax.ShapeDtypeStruct((8 * _NUM_CORE_BLOCKS, Cp), jnp.float32),
        grid=(_NUM_CORE_BLOCKS, nm_half),
        in_specs=[
            pl.BlockSpec((tile_m, K), lambda c, i: (c * nm_half + i, 0)),  # streamed
            pl.BlockSpec((K, Cp), lambda c, i: (0, 0)),                    # resident
        ],
        out_specs=pl.BlockSpec((8, Cp), lambda c, i: (c, 0)),              # per-core block
        compiler_params=pltpu.CompilerParams(
            dimension_semantics=("parallel", "arbitrary"),
            vmem_limit_bytes=vmem_limit,
        ),
    )(patches, wmat)

    # Combine per-core partials, fold BN into one per-channel scale/shift (tiny).
    # NOTE: E[y^2]-E[y]^2 in f32 is fine at these magnitudes; switch to shifted /
    # Welford partials if BN-stat precision ever matters beyond ~2e-2.
    ssum = stats[0]
    ssq = stats[1]
    for c in range(1, _NUM_CORE_BLOCKS):
        ssum = ssum + stats[8 * c]
        ssq = ssq + stats[8 * c + 1]
    mean = ssum / M                                         # divide by true M
    var = jnp.maximum(ssq / M - mean * mean, 0.0)           # biased batch variance
    scale = gamma_p * lax.rsqrt(var + eps)
    shift = beta_p - mean * scale

    # --- pass 2: recompute matmul, fused BN affine + LeakyReLU, narrow store ----
    out = pl.pallas_call(
        functools.partial(_norm_kernel, slope=slope, cout=Cout),
        out_shape=jax.ShapeDtypeStruct((Mp, Cout), jnp.float32),
        grid=(nm,),
        in_specs=[
            pl.BlockSpec((tile_m, K), lambda i: (i, 0)),
            pl.BlockSpec((K, Cp), lambda i: (0, 0)),        # weights, resident
            pl.BlockSpec((1, Cp), lambda i: (0, 0)),        # scale, resident
            pl.BlockSpec((1, Cp), lambda i: (0, 0)),        # shift, resident
        ],
        out_specs=pl.BlockSpec((tile_m, Cout), lambda i: (i, 0)),  # last dim == full dim
        compiler_params=pltpu.CompilerParams(
            dimension_semantics=("parallel",),              # shards across 2 TCs on v7x
            vmem_limit_bytes=vmem_limit,
        ),
    )(patches, wmat, scale.reshape(1, Cp), shift.reshape(1, Cp))

    # --- glue: slice off padding, back to NCDHW (narrow array, cheap) -----------
    # TODO(synk): keep the result channels-last downstream when possible; NCDHW is
    # kept here only for parity with the PyTorch module.
    out = out[:M].reshape(N, Do, Ho, Wo, Cout)
    return jnp.transpose(out, (0, 4, 1, 2, 3))              # (N, Cout, Do, Ho, Wo)


def _reference(x, w, b, gamma, beta, *, eps=1e-5, slope=1e-5):
    y = jax.lax.conv_general_dilated(
        x, w, window_strides=(2, 2, 2), padding=((1, 1), (1, 1), (1, 1)),
        dimension_numbers=("NCDHW", "OIDHW", "NCDHW"),
        precision=jax.lax.Precision.HIGHEST,
    ) + b[None, :, None, None, None]
    mean = y.mean(axis=(0, 2, 3, 4), keepdims=True)
    var = ((y - mean) ** 2).mean(axis=(0, 2, 3, 4), keepdims=True)
    y_hat = (y - mean) / jnp.sqrt(var + eps)
    z = gamma[None, :, None, None, None] * y_hat + beta[None, :, None, None, None]
    return jnp.where(z >= 0, z, slope * z)


if __name__ == "__main__":
    # Small shapes consistent with the module (5D NCDHW input, in_dims == out_dims).
    N, Cin, Cout, D, H, W = 2, 8, 8, 8, 8, 8

    key = jax.random.PRNGKey(0)
    kx, kw, kb, kg, kbt = jax.random.split(key, 5)
    x = jax.random.normal(kx, (N, Cin, D, H, W), dtype=jnp.float32)

    fan_in = Cin * 27
    bound = 1.0 / np.sqrt(fan_in)
    w = jax.random.uniform(kw, (Cout, Cin, 3, 3, 3), jnp.float32, -bound, bound)
    b = jax.random.uniform(kb, (Cout,), jnp.float32, -bound, bound)
    gamma = jax.random.uniform(kg, (Cout,), jnp.float32, 0.5, 1.5)
    beta = jax.random.uniform(kbt, (Cout,), jnp.float32, -0.5, 0.5)

    # tile_m=32 -> M=128 runs as grid (2, 2) in pass 1 and (4,) in pass 2,
    # exercising per-core partial-stats accumulation and pipelining.
    out = conv_pool_forward(x, w, b, gamma, beta, tile_m=32)
    out = jax.block_until_ready(out)

    ref = _reference(x, w, b, gamma, beta)
    # bf16 MXU inputs (f32 accumulation) vs the f32 HIGHEST reference => looser tolerance.
    np.testing.assert_allclose(np.asarray(out), np.asarray(ref), atol=2e-2, rtol=2e-2)

    print("KERNEL_OK")
</pallas_src>

<mosaic_0001>
module attributes {stable_mosaic.version = 11 : i64} {
  func.func @_stats_kernel(%arg0: i32, %arg1: i32, %arg2: memref<32x216xbf16, #tpu.memory_space<vmem>>, %arg3: memref<216x128xbf16, #tpu.memory_space<vmem>>, %arg4: memref<8x128xf32, #tpu.memory_space<vmem>>) attributes {dimension_semantics = [#tpu.dimension_semantics<parallel>, #tpu.dimension_semantics<arbitrary>], iteration_bounds = array<i64: 2, 2>, scalar_prefetch = 0 : i64, scratch_operands = 0 : i64, tpu.core_type = #tpu.core_type<tc>, window_params = [{transform_indices = @transform_0, window_bounds = array<i64: 32, 216>}, {pipeline_mode = #tpu.pipeline_mode<synchronous>, transform_indices = @transform_1, window_bounds = array<i64: 216, 128>}, {transform_indices = @transform_2, window_bounds = array<i64: 8, 128>}]} {
    %c0_i32 = arith.constant 0 : i32
    %0 = arith.cmpi eq, %arg1, %c0_i32 : i32
    %1 = arith.extui %0 : i1 to i32
    %c0_i32_0 = arith.constant 0 : i32
    %2 = arith.cmpi ne, %1, %c0_i32_0 : i32
    scf.if %2 {
      %cst_10 = arith.constant 0.000000e+00 : f32
      %15 = vector.broadcast %cst_10 : f32 to vector<8x128xf32>
      %c0_11 = arith.constant 0 : index
      %c0_12 = arith.constant 0 : index
      %16 = vector.load %arg4[%c0_11, %c0_12] : memref<8x128xf32, #tpu.memory_space<vmem>>, vector<8x128xf32>
      tpu.vector_store %arg4[%c0_11, %c0_12], %15 {strides = array<i32>} : memref<8x128xf32, #tpu.memory_space<vmem>>, vector<8x128xf32>,
    } else {
    }
    %c0 = arith.constant 0 : index
    %c0_1 = arith.constant 0 : index
    %3 = vector.load %arg2[%c0, %c0_1] : memref<32x216xbf16, #tpu.memory_space<vmem>>, vector<32x216xbf16>
    %c0_2 = arith.constant 0 : index
    %c0_3 = arith.constant 0 : index
    %4 = vector.load %arg3[%c0_2, %c0_3] : memref<216x128xbf16, #tpu.memory_space<vmem>>, vector<216x128xbf16>
    %cst = arith.constant dense<0.000000e+00> : vector<32x128xf32>
    %5 = tpu.matmul %3, %4, %cst {dimension_numbers = #tpu.dot_dimension_numbers<[1], [0], [0], [1], [0, 0, 1, 1], [], []>} : vector<32x216xbf16>, vector<216x128xbf16>, vector<32x128xf32> -> vector<32x128xf32>
    %cst_4 = arith.constant dense<0.000000e+00> : vector<128xf32>
    %6 = vector.multi_reduction <add>, %5, %cst_4 [0] : vector<32x128xf32> to vector<128xf32>
    %7 = vector.shape_cast %6 : vector<128xf32> to vector<1x128xf32>
    %8 = arith.mulf %5, %5 : vector<32x128xf32>
    %cst_5 = arith.constant dense<0.000000e+00> : vector<128xf32>
    %9 = vector.multi_reduction <add>, %8, %cst_5 [0] : vector<32x128xf32> to vector<128xf32>
    %10 = vector.shape_cast %9 : vector<128xf32> to vector<1x128xf32>
    %11 = tpu.concatenate %7, %10 in 0 : vector<1x128xf32>, vector<1x128xf32> -> vector<2x128xf32>
    %c0_6 = arith.constant 0 : index
    %c0_7 = arith.constant 0 : index
    %12 = vector.load %arg4[%c0_6, %c0_7] : memref<8x128xf32, #tpu.memory_space<vmem>>, vector<2x128xf32>
    %13 = arith.addf %12, %11 : vector<2x128xf32>
    %c0_8 = arith.constant 0 : index
    %c0_9 = arith.constant 0 : index
    %14 = vector.load %arg4[%c0_8, %c0_9] : memref<8x128xf32, #tpu.memory_space<vmem>>, vector<2x128xf32>
    tpu.vector_store %arg4[%c0_8, %c0_9], %13 {strides = array<i32>} : memref<8x128xf32, #tpu.memory_space<vmem>>, vector<2x128xf32>,
    return
  }
  func.func @transform_0(%arg0: i32, %arg1: i32) -> (i32, i32) {
    %c2_i32 = arith.constant 2 : i32
    %0 = arith.muli %arg0, %c2_i32 : i32
    %1 = arith.addi %0, %arg1 : i32
    %c0_i32 = arith.constant 0 : i32
    %c0_i32_0 = arith.constant 0 : i32
    return %1, %c0_i32 : i32, i32
  }
  func.func @transform_1(%arg0: i32, %arg1: i32) -> (i32, i32) {
    %c0_i32 = arith.constant 0 : i32
    %c0_i32_0 = arith.constant 0 : i32
    %c0_i32_1 = arith.constant 0 : i32
    return %c0_i32, %c0_i32_0 : i32, i32
  }
  func.func @transform_2(%arg0: i32, %arg1: i32) -> (i32, i32) {
    %c0_i32 = arith.constant 0 : i32
    %c0_i32_0 = arith.constant 0 : i32
    return %arg0, %c0_i32 : i32, i32
  }
}

</mosaic_0001>

<llo_original>
// kernel: tpu_custom_call.1
$region0: #{tpu_custom_call.1}
  #allocation0 [shape = 'u32[]', space=smem, size = 0x4, offset = 0x4, fixed_abs, tag = 'smem constant byte address 0x4 - core index']
  #allocation1 [shape = 'u32[144,128]{1,0:T(1,128)}', space=vmem, size = 0x12000, scoped, tag = 'internal scratch']
  %s0 = inlined_call_operand.vmem [shape: bf16[128,216], index: 0, kind: input, shape index: {}]
  %s1 = inlined_call_operand.vmem [shape: bf16[216,128], index: 1, kind: input, shape index: {}]
  %s2 = inlined_call_operand.hbm [shape: f32[16,128], index: 2, kind: output, shape index: {}]
  %s3 = sld [smem:[#allocation0]]
  $region45: #{tpu_custom_call.1} parent=0
    _
  %s5 = ssub.s32 1, %s3
  %s6 = scalar_select 0, %s5, %s3
  $region1: #{tpu_custom_call.1} parent=0
    #allocation2 [shape = 'u8[8192]{0}', space=vmem, size = 0x2000, scoped, tag = 'output window, operand 0']
    #allocation3 [shape = 's32[2]{0}', space=sflag, size = 0x8, scoped, tag = 'scoped memory for tpu_custom_call.1']
    %7 = vsyncpa [#allocation3], 0
    %s8 = scalar_lea.sflag [#allocation3], 1
    %9 = vsyncpa %s8, 0
    loop: start=0, step=1, limit=6
    $region2: #{tpu_custom_call.1} parent=1 // loop_pre_header
      _
    $region3: #{tpu_custom_call.1} parent=1 // loop_header
      %s11 = sphi 0, %s15
      %p12 = scmp.ge.s32.totalorder %s11, 6
      %s18 = sphi 0, %s30
      %s19 = sphi 0, %s26
      %s20 = sphi 0, %s18
      %s21 = sphi 0, %s19
      %s22 = sphi 0, %s20
      %s23 = sphi 0, %s21
      %s37 = sphi 0, %s39
      %s40 = sphi 0, %s37
      %s41 = sphi 0, %s40
      %s57 = sphi 0, %s41
      %s61 = sphi 0, %s61
      %s63 = sphi 0, %s61
      %s64 = sphi 0, %s63
      %s78 = sphi 0, %s64
      %s84 = sphi 0, %s86
      %s87 = sphi 0, %s84
      %s88 = sphi 0, %s87
      %s104 = sphi 0, %s88
    $region4: #{tpu_custom_call.1} parent=1 // loop_header_branch
      %14 = sbr.rel (%p12) target = $region8
    $region5: #{tpu_custom_call.1} parent=1 // loop_body
      %s16 = ssub.s32 %s11, 1
      %s17 = ssub.s32 %s11, 2
      %s24 = sadd.s32 1, %s19
      %p25 = scmp.ge.s32.totalorder %s24, 2
      %s26 = scalar_select %p25, 0, %s24
      %s27 = sadd.s32 1, %s18
      %s28 = scalar_select %p25, %s27, %s18
      %p29 = scmp.ge.s32.totalorder %s28, 2
      %s30 = scalar_select %p29, 0, %s28
      %s31 = smul.u32 %s18, 2
      %s32 = sadd.s32 %s31, %s19
      %s33 = smul.u32 %s30, 2
      %s34 = sadd.s32 %s33, %s26
      %s35 = ssub.s32 %s32, %s34
      %p36 = scmp.eq.s32.totalorder %s35, 0
      %s38 = sadd.s32 %s37, 1
      %s39 = scalar_select %p36, %s37, %s38
      %p42 = pneg %p36
      %p43 = scmp.eq.s32.totalorder %s11, 3
      %p44 = por %p42, %p43
      %p45 = scmp.ne.s32.totalorder %s37, %s40
      %p46 = scmp.eq.s32.totalorder %s11, 0
      %p47 = por %p45, %p46
      %p48 = scmp.ne.s32.totalorder %s37, %s40
      %p49 = scmp.eq.s32.totalorder %s16, 3
      %p50 = por %p48, %p49
      %p51 = scmp.ne.s32.totalorder %s40, %s41
      %p52 = scmp.eq.s32.totalorder %s16, 0
      %p53 = por %p51, %p52
      %p54 = scmp.ne.s32.totalorder %s40, %s41
      %p55 = scmp.eq.s32.totalorder %s17, 3
      %p56 = por %p54, %p55
      %p58 = scmp.ne.s32.totalorder %s41, %s57
      %p59 = scmp.eq.s32.totalorder %s17, 0
      %p60 = por %p58, %p59
      %s62 = sadd.s32 %s61, 1
      %p65 = scmp.eq.s32.totalorder %s11, 3
      %p66 = scmp.ne.s32.totalorder %s61, %s63
      %p67 = scmp.eq.s32.totalorder %s11, 0
      %p68 = por %p66, %p67
      %p69 = scmp.ne.s32.totalorder %s61, %s63
      %p70 = scmp.eq.s32.totalorder %s16, 3
      %p71 = por %p69, %p70
      %p72 = scmp.ne.s32.totalorder %s63, %s64
      %p73 = scmp.eq.s32.totalorder %s16, 0
      %p74 = por %p72, %p73
      %p75 = scmp.ne.s32.totalorder %s63, %s64
      %p76 = scmp.eq.s32.totalorder %s17, 3
      %p77 = por %p75, %p76
      %p79 = scmp.ne.s32.totalorder %s64, %s78
      %p80 = scmp.eq.s32.totalorder %s17, 0
      %p81 = por %p79, %p80
      %s82 = ssub.s32 %s18, %s30
      %p83 = scmp.eq.s32.totalorder %s82, 0
      %s85 = sadd.s32 %s84, 1
      %s86 = scalar_select %p83, %s84, %s85
      %p89 = pneg %p83
      %p90 = scmp.eq.s32.totalorder %s11, 3
      %p91 = por %p89, %p90
      %p92 = scmp.ne.s32.totalorder %s84, %s87
      %p93 = scmp.eq.s32.totalorder %s11, 0
      %p94 = por %p92, %p93
      %p95 = scmp.ne.s32.totalorder %s84, %s87
      %p96 = scmp.eq.s32.totalorder %s16, 3
      %p97 = por %p95, %p96
      %p98 = scmp.ne.s32.totalorder %s87, %s88
      %p99 = scmp.eq.s32.totalorder %s16, 0
      %p100 = por %p98, %p99
      %p101 = scmp.ne.s32.totalorder %s87, %s88
      %p102 = scmp.eq.s32.totalorder %s17, 3
      %p103 = por %p101, %p102
      %p105 = scmp.ne.s32.totalorder %s88, %s104
      %p106 = scmp.eq.s32.totalorder %s17, 0
      %p107 = por %p105, %p106
      %p108 = scmp.le.s32.totalorder 1, %s11
      %p109 = scmp.lt.s32.totalorder %s11, 5
      %p110 = pnand %p108, %p109
      %p111 = pneg %p110
      // Predicated region
      $region9: #{tpu_custom_call.1} parent=5 // pred_check
        _
      $region10: #{tpu_custom_call.1} parent=5 // pred_check_branch
        %113 = sbr.rel (%p110) target = $region12
      $region11: #{tpu_custom_call.1} parent=5 // pred_region
        %s114 = ssub.s32 %s11, 1
        // Predicated region
        $region13: #{tpu_custom_call.1} parent=11 // pred_check
          %p115 = pneg %p74
        $region14: #{tpu_custom_call.1} parent=11 // pred_check_branch
          %117 = sbr.rel (%p115) target = $region16
        $region15: #{tpu_custom_call.1} parent=11 // pred_region
          _
        $region16: #{tpu_custom_call.1} parent=11 // pred_fallthru
          _
      $region12: #{tpu_custom_call.1} parent=5 // pred_fallthru
        _
      %p118 = scmp.lt.s32.totalorder %s11, 4
      // Predicated region
      $region17: #{tpu_custom_call.1} parent=5 // pred_check
        %p119 = pneg %p118
      $region18: #{tpu_custom_call.1} parent=5 // pred_check_branch
        %121 = sbr.rel (%p119) target = $region20
      $region19: #{tpu_custom_call.1} parent=5 // pred_region
        // Predicated region
        $region21: #{tpu_custom_call.1} parent=19 // pred_check
          %p122 = pneg %p47
        $region22: #{tpu_custom_call.1} parent=19 // pred_check_branch
          %124 = sbr.rel (%p122) target = $region24
        $region23: #{tpu_custom_call.1} parent=19 // pred_region
          %s125 = smul.u32 %s18, 2
          %s126 = sadd.s32 %s125, %s19
          %s127 = smul.u32 4, %s126
          %p128 = scmp.lt.s32.totalorder %s127, 15
          %s129 = scalar_select %p128, %s127, 15
          %s130 = smul.addr %s129, 2
          %s131 = smul.addr %s130, 4
          %s132 = scalar_lea.vmem %s0, %s131
          %s133 = smul.u32 %s18, 2
          %s134 = sadd.s32 %s133, %s19
          %s135 = smul.u32 4, %s134
        $region24: #{tpu_custom_call.1} parent=19 // pred_fallthru
          _
      $region20: #{tpu_custom_call.1} parent=5 // pred_fallthru
        _
      %p136 = scmp.le.s32.totalorder 1, %s11
      %p137 = scmp.lt.s32.totalorder %s11, 5
      %p138 = pnand %p136, %p137
      %p139 = pneg %p138
      // Predicated region
      $region25: #{tpu_custom_call.1} parent=5 // pred_check
        _
      $region26: #{tpu_custom_call.1} parent=5 // pred_check_branch
        %141 = sbr.rel (%p138) target = $region28
      $region27: #{tpu_custom_call.1} parent=5 // pred_region
        %s142 = ssub.s32 %s11, 1
        %s143 = smul.u32 %s20, 2
        %s144 = sadd.s32 %s143, %s21
        %s145 = smul.u32 4, %s144
        %p146 = scmp.lt.s32.totalorder %s145, 15
        %s147 = scalar_select %p146, %s145, 15
        %s148 = smul.addr %s147, 2
        %s149 = smul.addr %s148, 4
        %s150 = scalar_lea.vmem %s0, %s149
        %p151 = pneg %p53
        %p152 = pneg %p50
        %p153 = pneg %p74
        %p154 = pneg %p71
        %p155 = pneg %p100
        %p156 = pneg %p97
        %s157 = sand.u32 %s87, 1
        %s158 = scalar_lea.sflag [#allocation3], %s157
        %s159 = sand.u32 %s87, 1
        %s160 = smul.addr %s159, 8
        %s161 = scalar_lea.vmem [#allocation2], %s160
        %s162 = smul.u32 %s20, 2
        %s163 = sadd.s32 %s162, %s21
        %s164 = smul.u32 4, %s163
        %p165 = scmp.lt.s32.totalorder %s164, 15
        %s166 = scalar_select %p165, %s164, 15
        %s167 = smul.addr %s166, 2
        %s168 = smul.addr %s167, 4
        %s169 = scalar_lea.vmem %s0, %s168
        %s170 = smul.u32 %s20, 2
        %s171 = sadd.s32 %s170, %s21
        %s172 = smul.u32 4, %s171
        %p174 = scmp.eq.s32.totalorder %s21, 0
        // Predicated region
        $region29: #{tpu_custom_call.1} parent=27 // pred_check
          %p175 = pneg %p174
        $region30: #{tpu_custom_call.1} parent=27 // pred_check_branch
          %177 = sbr.rel (%p175) target = $region32
        $region31: #{tpu_custom_call.1} parent=27 // pred_region
          %178 = vst [vmem:[%s161] sm:$0xff] 0.0
        $region32: #{tpu_custom_call.1} parent=27 // pred_fallthru
          _
        %v179 = vld [vmem:[%s169] sm:$0xff]
        %v180 = vld [vmem:[%s169 + $0x8] sm:$0xff]
        %v181 = vld [vmem:[%s169 + $0x10] sm:$0xff]
        %v182 = vld [vmem:[%s169 + $0x18] sm:$0xff]
        %v183 = vld [vmem:[%s1] sm:$0xf]
        %v184 = vld [vmem:[%s1 + $0x4] sm:$0xf]
        %v185 = vld [vmem:[%s1 + $0x8] sm:$0xf]
        %v186 = vld [vmem:[%s1 + $0xc] sm:$0xf]
        %v187 = vld [vmem:[%s1 + $0x10] sm:$0xf]
        %v188 = vld [vmem:[%s1 + $0x14] sm:$0xf]
        %v189 = vld [vmem:[%s1 + $0x18] sm:$0xf]
        %v190 = vld [vmem:[%s1 + $0x1c] sm:$0xf]
        %v191 = vld [vmem:[%s1 + $0x20] sm:$0xf]
        %v192 = vld [vmem:[%s1 + $0x24] sm:$0xf]
        %v193 = vld [vmem:[%s1 + $0x28] sm:$0xf]
        %v194 = vld [vmem:[%s1 + $0x2c] sm:$0xf]
        %v195 = vld [vmem:[%s1 + $0x30] sm:$0xf]
        %v196 = vld [vmem:[%s1 + $0x34] sm:$0xf]
        %v197 = vld [vmem:[%s1 + $0x38] sm:$0xf]
        %v198 = vld [vmem:[%s1 + $0x3c] sm:$0xf]
        %v199 = vld [vmem:[%s1 + $0x40] sm:$0xf]
        %v200 = vld [vmem:[%s1 + $0x44] sm:$0xf]
        %v201 = vld [vmem:[%s1 + $0x48] sm:$0xf]
        %v202 = vld [vmem:[%s1 + $0x4c] sm:$0xf]
        %v203 = vld [vmem:[%s1 + $0x50] sm:$0xf]
        %v204 = vld [vmem:[%s1 + $0x54] sm:$0xf]
        %v205 = vld [vmem:[%s1 + $0x58] sm:$0xf]
        %v206 = vld [vmem:[%s1 + $0x5c] sm:$0xf]
        %v207 = vld [vmem:[%s1 + $0x60] sm:$0xf]
        %v208 = vld [vmem:[%s1 + $0x64] sm:$0xf]
        %v209 = vld [vmem:[%s1 + $0x68] sm:$0xf]
        %v214 = vunpack.c.l.b16 %v179
        %v215 = vunpack.c.h.b16 %v179
        %v216 = vunpack.c.l.b16 %v180
        %v217 = vunpack.c.h.b16 %v180
        %v218 = vunpack.c.l.b16 %v181
        %v219 = vunpack.c.h.b16 %v181
        %v220 = vunpack.c.l.b16 %v182
        %v221 = vunpack.c.h.b16 %v182
        %v222 = vpack.c.b16 %v216, %v214
        %v223 = vpack.c.b16 %v217, %v215
        %v224 = vpack.c.b16 %v220, %v218
        %v225 = vpack.c.b16 %v221, %v219
        %v255 = vunpack.c.l.b16 %v183
        %v256 = vunpack.c.l.b16 %v184
        %v257 = vunpack.c.l.b16 %v185
        %v258 = vunpack.c.l.b16 %v186
        %v259 = vunpack.c.l.b16 %v187
        %v260 = vunpack.c.l.b16 %v188
        %v261 = vunpack.c.l.b16 %v189
        %v262 = vunpack.c.l.b16 %v190
        %v263 = vunpack.c.l.b16 %v191
        %v264 = vunpack.c.l.b16 %v192
        %v265 = vunpack.c.l.b16 %v193
        %v266 = vunpack.c.l.b16 %v194
        %v267 = vunpack.c.l.b16 %v195
        %v268 = vunpack.c.l.b16 %v196
        %v269 = vunpack.c.l.b16 %v197
        %v270 = vunpack.c.l.b16 %v198
        %v271 = vunpack.c.l.b16 %v199
        %v272 = vunpack.c.l.b16 %v200
        %v273 = vunpack.c.l.b16 %v201
        %v274 = vunpack.c.l.b16 %v202
        %v275 = vunpack.c.l.b16 %v203
        %v276 = vunpack.c.l.b16 %v204
        %v277 = vunpack.c.l.b16 %v205
        %v278 = vunpack.c.l.b16 %v206
        %v279 = vunpack.c.l.b16 %v207
        %v280 = vunpack.c.l.b16 %v208
        %v281 = vunpack.c.l.b16 %v209
        %v282 = vpack.c.b16 %v256, %v255
        %v283 = vpack.c.b16 %v258, %v257
        %v284 = vpack.c.b16 %v260, %v259
        %v285 = vpack.c.b16 %v262, %v261
        %v286 = vpack.c.b16 %v264, %v263
        %v287 = vpack.c.b16 %v266, %v265
        %v288 = vpack.c.b16 %v268, %v267
        %v289 = vpack.c.b16 %v270, %v269
        %v290 = vpack.c.b16 %v272, %v271
        %v291 = vpack.c.b16 %v274, %v273
        %v292 = vpack.c.b16 %v276, %v275
        %v293 = vpack.c.b16 %v278, %v277
        %v294 = vpack.c.b16 %v280, %v279
        %v295 = vpack.c.b16 %v281, %v281
        %vm309 = vcmask 719872
        %v311 = vsel %vm309, %v223, 0
        %v314 = vsel %vm309, %v225, 0
        %vm316 = vcmask 1043456
        %v318 = vsel %vm316, %v295, 0
        %320 = vmatprep.subr.bf16.mxu0 0
        %321 = vmatpush1.bf16.msra.mxu0 %v289
        %322 = vmatprep.subr.bf16.mxu0 0
        %323 = vmatpush1.bf16.msra.mxu0 %v288
        %324 = vmatprep.subr.bf16.mxu0 0
        %325 = vmatpush1.bf16.msra.mxu0 %v287
        %326 = vmatprep.subr.bf16.mxu0 0
        %327 = vmatpush1.bf16.msra.mxu0 %v286
        %328 = vmatprep.subr.bf16.mxu0 0
        %329 = vmatpush1.bf16.msra.mxu0 %v285
        %330 = vmatprep.subr.bf16.mxu0 0
        %331 = vmatpush1.bf16.msra.mxu0 %v284
        %332 = vmatprep.subr.bf16.mxu0 0
        %333 = vmatpush1.bf16.msra.mxu0 %v283
        %334 = vmatprep.subr.bf16.mxu0 0
        %335 = vmatpush1.bf16.msra.mxu0 %v282
        %336 = vmatprep.subr.bf16.mxu0 0
        %337 = vmatpush2.bf16.msra.mxu0 0
        %338 = vmatprep.subr.bf16.mxu0 0
        %339 = vmatpush2.bf16.msra.mxu0 0
        %340 = vmatprep.subr.bf16.mxu0 0
        %341 = vmatpush2.bf16.msra.mxu0 %v318
        %342 = vmatprep.subr.bf16.mxu0 0
        %343 = vmatpush2.bf16.msra.mxu0 %v294
        %344 = vmatprep.subr.bf16.mxu0 0
        %345 = vmatpush2.bf16.msra.mxu0 %v293
        %346 = vmatprep.subr.bf16.mxu0 0
        %347 = vmatpush2.bf16.msra.mxu0 %v292
        %348 = vmatprep.subr.bf16.mxu0 0
        %349 = vmatpush2.bf16.msra.mxu0 %v291
        %350 = vmatprep.subr.bf16.mxu0 0
        %351 = vmatpush2.bf16.msra.mxu0 %v290
        %352 = vmatprep.mubr.bf16.mxu0 %v311
        %353 = vmatmul.mubr.bf16.gmra.mxu0 %v222
        %v354 = vpop.f32.mrf.mxu0
        %v355 = vadd.f32 0.0, %v354
        %v356 = vpop.f32.mrf.mxu0
        %v357 = vpop.f32.mrf.mxu0
        %v358 = vadd.f32 0.0, %v357
        %v359 = vpop.f32.mrf.mxu0
        %360 = vmatprep.mubr.bf16.mxu0 %v314
        %361 = vmatmul.mubr.bf16.gmra.mxu0 %v224
        %v362 = vpop.f32.mrf.mxu0
        %v363 = vadd.f32 0.0, %v362
        %v364 = vpop.f32.mrf.mxu0
        %v365 = vpop.f32.mrf.mxu0
        %v366 = vadd.f32 0.0, %v365
        %v367 = vpop.f32.mrf.mxu0
        %368 = vdwg.mxu0
        %v369 = vadd.f32 %v355, %v358
        %v370 = vadd.f32 %v369, %v363
        %v371 = vadd.f32 %v370, %v366
        %v372 = vrot.slane %v371, 4
        %v373 = vadd.f32 %v371, %v372
        %v374 = vrot.slane %v373, 2
        %v375 = vadd.f32 %v373, %v374
        %v376 = vrot.slane %v375, 1
        %v377 = vadd.f32 %v375, %v376
        %v378 = vmul.f32 %v355, %v355
        %v379 = vmul.f32 %v358, %v358
        %v380 = vmul.f32 %v363, %v363
        %v381 = vmul.f32 %v366, %v366
        %v382 = vadd.f32 %v378, %v379
        %v383 = vadd.f32 %v382, %v380
        %v384 = vadd.f32 %v383, %v381
        %v385 = vrot.slane %v384, 4
        %v386 = vadd.f32 %v384, %v385
        %v387 = vrot.slane %v386, 2
        %v388 = vadd.f32 %v386, %v387
        %v389 = vrot.slane %v388, 1
        %v390 = vadd.f32 %v388, %v389
        %vm391 = vcmask 1040384
        %v392 = vsel %vm391, %v377, %v390
        %v393 = vld [vmem:[%s161] sm:$0x3]
        %v394 = vadd.f32 %v393, %v392
        %395 = vst [vmem:[%s161] sm:$0x3] %v394
        %s396 = sand.u32 %s87, 1
        %s397 = scalar_lea.sflag [#allocation3], %s396
        %s398 = sand.u32 %s87, 1
        %s399 = smul.addr %s398, 8
        %s400 = scalar_lea.vmem [#allocation2], %s399
        // Predicated region
        $region33: #{tpu_custom_call.1} parent=27 // pred_check
          %p401 = pneg %p97
        $region34: #{tpu_custom_call.1} parent=27 // pred_check_branch
          %403 = sbr.rel (%p401) target = $region36
        $region35: #{tpu_custom_call.1} parent=27 // pred_region
          %s405 = ssub.s32 128, 128
          %406 = vsyncadd %s397, %s405
          %s407 = smul.addr %s20, 128
          %s408 = scalar_lea.hbm %s2, %s407
          %s410 = sshll.u32 %s400, 4
          %s411 = int_to_ptr.vmem [resolvable:$true] %s410
          %413 = dma.vmem_to_hbm [thread:$0]  %s411, 128, %s408, %s397
        $region36: #{tpu_custom_call.1} parent=27 // pred_fallthru
          _
      $region28: #{tpu_custom_call.1} parent=5 // pred_fallthru
        _
      %p414 = scmp.le.s32.totalorder 2, %s11
      // Predicated region
      $region37: #{tpu_custom_call.1} parent=5 // pred_check
        %p415 = pneg %p414
      $region38: #{tpu_custom_call.1} parent=5 // pred_check_branch
        %417 = sbr.rel (%p415) target = $region40
      $region39: #{tpu_custom_call.1} parent=5 // pred_region
        %s418 = ssub.s32 %s11, 2
        // Predicated region
        $region41: #{tpu_custom_call.1} parent=39 // pred_check
          %p419 = pneg %p103
        $region42: #{tpu_custom_call.1} parent=39 // pred_check_branch
          %421 = sbr.rel (%p419) target = $region44
        $region43: #{tpu_custom_call.1} parent=39 // pred_region
          %s422 = sand.u32 %s88, 1
          %s423 = scalar_lea.sflag [#allocation3], %s422
          %s424 = sand.u32 %s88, 1
          %s425 = smul.addr %s424, 8
          %s426 = scalar_lea.vmem [#allocation2], %s425
          %427 = dma.done %s423, 128
        $region44: #{tpu_custom_call.1} parent=39 // pred_fallthru
          _
      $region40: #{tpu_custom_call.1} parent=5 // pred_fallthru
        _
    $region6: #{tpu_custom_call.1} parent=1 // loop_footer
      %s15 = sadd.s32 1, %s11
    $region7: #{tpu_custom_call.1} parent=1 // loop_footer_branch
      %10 = sbr.rel target = $region3
    $region8: #{tpu_custom_call.1} parent=1 // loop_exit
      _
    %428 = vsyncpa [#allocation3], 1
    %s429 = scalar_lea.sflag [#allocation3], 1
    %430 = vsyncpa %s429, 1

</llo_original>
